<compile_context>
chip_gen: v7x
topology: tpu7x:2x2x1
jax: 0.10.0
libtpu: 0.0.40
codegen_flags: <defaults>
</compile_context>

<pallas_src>
import functools

import jax
import jax.numpy as jnp
from jax.experimental import pallas as pl
from jax.experimental.pallas import tpu as pltpu


def _round_up(x, m):
    return (x + m - 1) // m * m


# ----------------------------------------------------------------------------
# Kernel: one GATConv layer, tiled over destination-node rows.
# ----------------------------------------------------------------------------
def _gat_layer_kernel(adj_ref, xs_ref, xd_ref, wsrc_ref, wdst_ref, bias_ref,
                      out_ref, *, num_heads, out_feats, has_residual,
                      apply_relu, head_mean, neg_slope):
    H, F = num_heads, out_feats
    HF = H * F

    # Edge mask for this dst-row tile (bf16 0/1 adjacency -> bool); folded
    # straight into the leaky-relu select below (no additive adj_bias tensor).
    mask = adj_ref[...] > 0                                        # (T, Ns) bool

    # --- source side (all nodes): features + left scores, ONE fused matmul ---
    # wsrc = [W | W @ blockdiag(attn_l)]  =>  proj_src = [feat_src | el]
    xs = xs_ref[...].astype(jnp.bfloat16)                          # (Ns, Fin)
    proj_src = jnp.dot(xs, wsrc_ref[...],
                       preferred_element_type=jnp.float32)         # (Ns, HF+H)
    feat_src = proj_src[:, :HF].astype(jnp.bfloat16)               # (Ns, HF)
    el_t = proj_src[:, HF:].T                                      # (H, Ns): one small transpose
                                                                   # instead of H relayouts

    # --- destination side (this tile): right scores + residual, ONE matmul ---
    # wdst = [W @ blockdiag(attn_r) | res_W]  =>  proj_dst = [er | res]
    xd = xd_ref[...].astype(jnp.bfloat16)                          # (T, Fin)
    proj_dst = jnp.dot(xd, wdst_ref[...],
                       preferred_element_type=jnp.float32)         # (T, H [+ res])
    er = proj_dst[:, :H]                                           # (T, H)

    head_outs = []
    for hd in range(H):
        # e[dst, src] = leaky_relu(el[src] + er[dst]) on existing edges only.
        e = er[:, hd:hd + 1] + el_t[hd:hd + 1, :]                  # (T, Ns) f32
        e = jnp.where(mask, jnp.where(e > 0, e, neg_slope * e), -1e30)
        m = jnp.max(e, axis=-1, keepdims=True)                     # (T, 1)
        p = jnp.exp(e - m)                                         # (T, Ns) f32 (v5e-safe)
        s = jnp.sum(p, axis=-1, keepdims=True)                     # (T, 1)
        # Aggregate with unnormalized probs; normalize AFTER the matmul
        # (T*F multiplies instead of T*Ns) with the EUP reciprocal.
        agg = jnp.dot(p.astype(jnp.bfloat16),
                      feat_src[:, hd * F:(hd + 1) * F],
                      preferred_element_type=jnp.float32)          # (T, F)
        head_outs.append(agg * pl.reciprocal(s, approx=True))

    bias = bias_ref[...]                                           # (1, HF) or (1, F)

    if head_mean:
        # Final layer: mean over heads folded in.  Residual weights and bias
        # were pre-summed over heads in the wrapper -> no concat / re-slice.
        out = head_outs[0]
        for hd in range(1, H):
            out = out + head_outs[hd]
        if has_residual:
            out = out + proj_dst[:, H:]                            # head-summed residual (T, F)
        out = (out + bias) * (1.0 / H)
        # (GAT_encoder's last layer has activation=None; a per-head activation
        #  would have to be applied before the mean.)
        out_ref[...] = out
    else:
        out = jnp.concatenate(head_outs, axis=-1)                  # (T, HF) lane-dense
        if has_residual:
            out = out + proj_dst[:, H:]                            # (T, HF)
        out = out + bias
        if apply_relu:
            out = jnp.maximum(out, 0.0)
        out_ref[...] = out


# ----------------------------------------------------------------------------
# Wrapper
# ----------------------------------------------------------------------------
def _block_diag_attn(a):
    """(H, F) per-head attention vector -> (H*F, H) block-diagonal matrix."""
    H, F = a.shape
    eye = jnp.eye(H, dtype=a.dtype)
    return (a[:, :, None] * eye[:, None, :]).reshape(H * F, H)


def _prep_layer_weights(params, cfg):
    """Fold attention vectors (and head-mean sums) into the fc weights."""
    W, attn_l, attn_r, bias, res_W = params
    H, F = cfg["num_heads"], cfg["out_feats"]
    head_mean = cfg["head_mean"]
    Wl = W @ _block_diag_attn(attn_l)                      # (Fin, H)
    Wr = W @ _block_diag_attn(attn_r)                      # (Fin, H)
    w_src = jnp.concatenate([W, Wl], axis=1).astype(jnp.bfloat16)   # (Fin, HF+H)
    dst_parts = [Wr]
    if cfg["use_residual"]:
        rw = res_W
        if head_mean:                                      # pre-sum residual over heads
            rw = rw.reshape(-1, H, F).sum(axis=1)          # (Fin, F)
        dst_parts.append(rw)
    w_dst = jnp.concatenate(dst_parts, axis=1).astype(jnp.bfloat16)
    if head_mean:                                          # pre-sum bias over heads
        b = bias.reshape(H, F).sum(axis=0, keepdims=True).astype(jnp.float32)
    else:
        b = bias.reshape(1, H * F).astype(jnp.float32)
    return w_src, w_dst, b


def _gat_layer_forward(adj_b16, x, w_src, w_dst, b, cfg, tile_rows,
                       vmem_limit_bytes=None):
    Np, Fin = x.shape
    H, F = cfg["num_heads"], cfg["out_feats"]
    out_width = F if cfg["head_mean"] else H * F
    assert not (cfg["head_mean"] and cfg["apply_relu"])

    kernel = functools.partial(
        _gat_layer_kernel, num_heads=H, out_feats=F,
        has_residual=cfg["use_residual"], apply_relu=cfg["apply_relu"],
        head_mean=cfg["head_mean"], neg_slope=0.2)

    return pl.pallas_call(
        kernel,
        out_shape=jax.ShapeDtypeStruct((Np, out_width), jnp.float32),
        grid=(pl.cdiv(Np, tile_rows),),
        in_specs=[
            pl.BlockSpec((tile_rows, Np), lambda i: (i, 0)),      # adj dst tile, all srcs
            pl.BlockSpec((Np, Fin), lambda i: (0, 0)),            # x (src side), resident
            pl.BlockSpec((tile_rows, Fin), lambda i: (i, 0)),     # x dst tile
            pl.BlockSpec(w_src.shape, lambda i: (0, 0)),          # fused [W | W@al]
            pl.BlockSpec(w_dst.shape, lambda i: (0, 0)),          # fused [W@ar | res_W]
            pl.BlockSpec(b.shape, lambda i: (0, 0)),              # bias
        ],
        out_specs=pl.BlockSpec((tile_rows, out_width), lambda i: (i, 0)),
        compiler_params=pltpu.CompilerParams(
            dimension_semantics=("parallel",),
            vmem_limit_bytes=vmem_limit_bytes),
    )(adj_b16, x, x, w_src, w_dst, b)


def gat_encoder_forward(adj, inputs, layer_params, layer_cfgs, *, tile_rows=64,
                        vmem_limit_bytes=None):
    """Mirrors GAT_encoder.forward in eval mode (dropout = identity).

    Tile-size guidance: per-tile temps scale ~10*T*N bytes plus the resident
    (N, Fin) features; T=256-512 with the bf16 adjacency mask stays well inside
    v7x's 64 MiB VMEM for N up to a few thousand; larger tiles (or full
    residency) are fine on v5e/v6e (128 MiB).
    """
    N = inputs.shape[0]
    tile_rows = _round_up(max(8, min(tile_rows, _round_up(N, 8))), 8)
    Np = _round_up(N, tile_rows)

    # Pad to the tile grid.  Padded dst rows are fully masked (and dropped at
    # the end); padded src columns are never attended to by real rows.
    adj_p = jnp.zeros((Np, Np), jnp.float32).at[:N, :N].set(adj.astype(jnp.float32))
    adj_b16 = (adj_p > 0).astype(jnp.bfloat16)             # bf16 mask: half the DMA bytes
    h = jnp.zeros((Np, inputs.shape[1]), jnp.float32).at[:N, :].set(
        inputs.astype(jnp.float32))

    for params, cfg in zip(layer_params, layer_cfgs):
        w_src, w_dst, b = _prep_layer_weights(params, cfg)
        h = _gat_layer_forward(adj_b16, h, w_src, w_dst, b, cfg, tile_rows,
                               vmem_limit_bytes)
        # TODO(synk): nn.Dropout between layers omitted (eval-mode identity).
    return h[:N]


# ----------------------------------------------------------------------------
# Parameter construction (mirrors GAT_encoder.__init__ shapes)
# ----------------------------------------------------------------------------
def init_gat_layer(key, in_feats, out_feats, num_heads, residual):
    k1, k2, k3, k4, k5 = jax.random.split(key, 5)
    W = 0.1 * jax.random.normal(k1, (in_feats, num_heads * out_feats), jnp.float32)
    attn_l = 0.1 * jax.random.normal(k2, (num_heads, out_feats), jnp.float32)
    attn_r = 0.1 * jax.random.normal(k3, (num_heads, out_feats), jnp.float32)
    bias = 0.01 * jax.random.normal(k4, (num_heads, out_feats), jnp.float32)
    if residual:
        if in_feats == num_heads * out_feats:
            res_W = jnp.eye(in_feats, dtype=jnp.float32)      # DGL Identity residual
        else:
            res_W = 0.1 * jax.random.normal(
                k5, (in_feats, num_heads * out_feats), jnp.float32)
    else:
        res_W = None
    return (W, attn_l, attn_r, bias, res_W)


def build_gat_encoder(key, hid_size, out_size, heads, num_layers):
    layer_params, layer_cfgs = [], []
    keys = jax.random.split(key, num_layers)
    for i in range(num_layers):
        if i == 0:
            in_f, out_f, res, act = hid_size, hid_size, False, True
        elif i == num_layers - 1:
            in_f, out_f, res, act = hid_size * heads[i - 1], out_size, True, False
        else:
            in_f, out_f, res, act = hid_size * heads[i - 1], hid_size, True, True
        layer_params.append(init_gat_layer(keys[i], in_f, out_f, heads[i], res))
        layer_cfgs.append(dict(num_heads=heads[i], out_feats=out_f,
                               use_residual=res, apply_relu=act,
                               head_mean=(i == num_layers - 1)))
    return layer_params, layer_cfgs


# ----------------------------------------------------------------------------
# Pure-JAX f32 reference (for the bf16-tolerance correctness check)
# ----------------------------------------------------------------------------
def gat_encoder_reference(adj, inputs, layer_params, layer_cfgs):
    mask = adj > 0.0
    h = inputs
    for (W, attn_l, attn_r, bias, res_W), cfg in zip(layer_params, layer_cfgs):
        H, F = cfg["num_heads"], cfg["out_feats"]
        feat = h @ W
        feat_h = feat.reshape(-1, H, F)
        el = jnp.einsum("nhf,hf->nh", feat_h, attn_l)
        er = jnp.einsum("nhf,hf->nh", feat_h, attn_r)
        outs = []
        for hd in range(H):
            e = er[:, hd][:, None] + el[:, hd][None, :]
            e = jnp.where(e > 0, e, 0.2 * e)
            e = jnp.where(mask, e, -jnp.inf)
            a = jax.nn.softmax(e, axis=-1)
            outs.append(a @ feat_h[:, hd, :])
        out = jnp.concatenate(outs, axis=-1)
        if cfg["use_residual"]:
            out = out + h @ res_W
        out = out + bias.reshape(1, -1)
        if cfg["apply_relu"]:
            out = jnp.maximum(out, 0.0)
        if cfg["head_mean"]:
            h = out.reshape(-1, H, F).mean(axis=1)
        else:
            h = out
    return h


if __name__ == "__main__":
    key = jax.random.PRNGKey(0)
    k_graph, k_feat, k_params = jax.random.split(key, 3)

    # Small synthetic problem consistent with the module's forward.
    N = 128           # nodes (2 destination-row tiles of 64 -> exercises the grid)
    hid_size = 32
    out_size = 16
    heads = [2, 2, 2]
    num_layers = 3

    # Dense adjacency with self-loops (adj[dst, src]); self-loops guarantee every
    # destination row has at least one incoming edge (softmax well defined).
    adj = jax.random.bernoulli(k_graph, 0.1, (N, N)).astype(jnp.float32)
    adj = jnp.maximum(adj, jnp.eye(N, dtype=jnp.float32))

    inputs = jax.random.normal(k_feat, (N, hid_size), jnp.float32)

    layer_params, layer_cfgs = build_gat_encoder(
        k_params, hid_size, out_size, heads, num_layers)

    out = gat_encoder_forward(adj, inputs, layer_params, layer_cfgs, tile_rows=64)
    out = jax.block_until_ready(out)

    assert out.shape == (N, out_size), out.shape
    assert bool(jnp.all(jnp.isfinite(out)))

    ref = gat_encoder_reference(adj, inputs, layer_params, layer_cfgs)
    max_err = float(jnp.max(jnp.abs(out - ref)))
    assert max_err < 5e-2, f"max abs err vs f32 reference: {max_err}"

    print("KERNEL_OK")
</pallas_src>

<mosaic_0001>
module attributes {stable_mosaic.version = 11 : i64} {
  func.func @_gat_layer_kernel(%arg0: i32, %arg1: memref<64x128xbf16, #tpu.memory_space<vmem>>, %arg2: memref<128x32xf32, #tpu.memory_space<vmem>>, %arg3: memref<64x32xf32, #tpu.memory_space<vmem>>, %arg4: memref<32x66xbf16, #tpu.memory_space<vmem>>, %arg5: memref<32x2xbf16, #tpu.memory_space<vmem>>, %arg6: memref<1x64xf32, #tpu.memory_space<vmem>>, %arg7: memref<64x64xf32, #tpu.memory_space<vmem>>) attributes {dimension_semantics = [#tpu.dimension_semantics<parallel>], iteration_bounds = array<i64: 2>, scalar_prefetch = 0 : i64, scratch_operands = 0 : i64, tpu.core_type = #tpu.core_type<tc>, window_params = [{transform_indices = @transform_0, window_bounds = array<i64: 64, 128>}, {pipeline_mode = #tpu.pipeline_mode<synchronous>, transform_indices = @transform_1, window_bounds = array<i64: 128, 32>}, {transform_indices = @transform_2, window_bounds = array<i64: 64, 32>}, {pipeline_mode = #tpu.pipeline_mode<synchronous>, transform_indices = @transform_3, window_bounds = array<i64: 32, 66>}, {pipeline_mode = #tpu.pipeline_mode<synchronous>, transform_indices = @transform_4, window_bounds = array<i64: 32, 2>}, {pipeline_mode = #tpu.pipeline_mode<synchronous>, transform_indices = @transform_5, window_bounds = array<i64: 1, 64>}, {transform_indices = @transform_6, window_bounds = array<i64: 64, 64>}]} {
    %c0 = arith.constant 0 : index
    %c0_0 = arith.constant 0 : index
    %0 = vector.load %arg1[%c0, %c0_0] : memref<64x128xbf16, #tpu.memory_space<vmem>>, vector<64x128xbf16>
    %cst = arith.constant 0.000000e+00 : bf16
    %1 = vector.broadcast %cst : bf16 to vector<64x128xbf16>
    %2 = arith.cmpf ogt, %0, %1 : vector<64x128xbf16>
    %c0_1 = arith.constant 0 : index
    %c0_2 = arith.constant 0 : index
    %3 = vector.load %arg2[%c0_1, %c0_2] : memref<128x32xf32, #tpu.memory_space<vmem>>, vector<128x32xf32>
    %4 = arith.truncf %3 : vector<128x32xf32> to vector<128x32xbf16>
    %c0_3 = arith.constant 0 : index
    %c0_4 = arith.constant 0 : index
    %5 = vector.load %arg4[%c0_3, %c0_4] : memref<32x66xbf16, #tpu.memory_space<vmem>>, vector<32x66xbf16>
    %cst_5 = arith.constant dense<0.000000e+00> : vector<128x66xf32>
    %6 = tpu.matmul %4, %5, %cst_5 {dimension_numbers = #tpu.dot_dimension_numbers<[1], [0], [0], [1], [0, 0, 1, 1], [], []>} : vector<128x32xbf16>, vector<32x66xbf16>, vector<128x66xf32> -> vector<128x66xf32>
    %7 = vector.extract_strided_slice %6 {offsets = [0, 0], sizes = [128, 64], strides = [1, 1]} : vector<128x66xf32> to vector<128x64xf32>
    %8 = arith.truncf %7 : vector<128x64xf32> to vector<128x64xbf16>
    %9 = vector.extract_strided_slice %6 {offsets = [0, 64], sizes = [128, 2], strides = [1, 1]} : vector<128x66xf32> to vector<128x2xf32>
    %10 = tpu.transpose %9, [1, 0] : vector<128x2xf32> -> vector<2x128xf32>
    %c0_6 = arith.constant 0 : index
    %c0_7 = arith.constant 0 : index
    %11 = vector.load %arg3[%c0_6, %c0_7] : memref<64x32xf32, #tpu.memory_space<vmem>>, vector<64x32xf32>
    %12 = arith.truncf %11 : vector<64x32xf32> to vector<64x32xbf16>
    %c0_8 = arith.constant 0 : index
    %c0_9 = arith.constant 0 : index
    %13 = vector.load %arg5[%c0_8, %c0_9] : memref<32x2xbf16, #tpu.memory_space<vmem>>, vector<32x2xbf16>
    %cst_10 = arith.constant dense<0.000000e+00> : vector<64x2xf32>
    %14 = tpu.matmul %12, %13, %cst_10 {dimension_numbers = #tpu.dot_dimension_numbers<[1], [0], [0], [1], [0, 0, 1, 1], [], []>} : vector<64x32xbf16>, vector<32x2xbf16>, vector<64x2xf32> -> vector<64x2xf32>
    %15 = vector.extract_strided_slice %14 {offsets = [0, 0], sizes = [64, 1], strides = [1, 1]} : vector<64x2xf32> to vector<64x1xf32>
    %16 = vector.extract_strided_slice %10 {offsets = [0, 0], sizes = [1, 128], strides = [1, 1]} : vector<2x128xf32> to vector<1x128xf32>
    %17 = vector.broadcast %15 : vector<64x1xf32> to vector<64x128xf32>
    %18 = vector.broadcast %16 : vector<1x128xf32> to vector<64x128xf32>
    %19 = arith.addf %17, %18 : vector<64x128xf32>
    %cst_11 = arith.constant 0.000000e+00 : f32
    %20 = vector.broadcast %cst_11 : f32 to vector<64x128xf32>
    %21 = arith.cmpf ogt, %19, %20 : vector<64x128xf32>
    %cst_12 = arith.constant 2.000000e-01 : f32
    %22 = vector.broadcast %cst_12 : f32 to vector<64x128xf32>
    %23 = arith.mulf %22, %19 : vector<64x128xf32>
    %24 = arith.select %21, %19, %23 : vector<64x128xi1>, vector<64x128xf32>
    %cst_13 = arith.constant -1.000000e+30 : f32
    %25 = vector.broadcast %cst_13 : f32 to vector<64x128xf32>
    %26 = arith.select %2, %24, %25 : vector<64x128xi1>, vector<64x128xf32>
    %cst_14 = arith.constant dense<0xFF800000> : vector<64xf32>
    %27 = vector.multi_reduction <maximumf>, %26, %cst_14 [1] : vector<64x128xf32> to vector<64xf32>
    %28 = vector.shape_cast %27 : vector<64xf32> to vector<64x1xf32>
    %29 = vector.broadcast %28 : vector<64x1xf32> to vector<64x128xf32>
    %30 = arith.subf %26, %29 : vector<64x128xf32>
    %31 = math.exp %30 : vector<64x128xf32>
    %cst_15 = arith.constant dense<0.000000e+00> : vector<64xf32>
    %32 = vector.multi_reduction <add>, %31, %cst_15 [1] : vector<64x128xf32> to vector<64xf32>
    %33 = vector.shape_cast %32 : vector<64xf32> to vector<64x1xf32>
    %34 = arith.truncf %31 : vector<64x128xf32> to vector<64x128xbf16>
    %35 = vector.extract_strided_slice %8 {offsets = [0, 0], sizes = [128, 32], strides = [1, 1]} : vector<128x64xbf16> to vector<128x32xbf16>
    %cst_16 = arith.constant dense<0.000000e+00> : vector<64x32xf32>
    %36 = tpu.matmul %34, %35, %cst_16 {dimension_numbers = #tpu.dot_dimension_numbers<[1], [0], [0], [1], [0, 0, 1, 1], [], []>} : vector<64x128xbf16>, vector<128x32xbf16>, vector<64x32xf32> -> vector<64x32xf32>
    %37 = tpu.reciprocal %33 {approx = true} : vector<64x1xf32> -> vector<64x1xf32>
    %38 = vector.broadcast %37 : vector<64x1xf32> to vector<64x32xf32>
    %39 = arith.mulf %36, %38 : vector<64x32xf32>
    %40 = vector.extract_strided_slice %14 {offsets = [0, 1], sizes = [64, 1], strides = [1, 1]} : vector<64x2xf32> to vector<64x1xf32>
    %41 = vector.extract_strided_slice %10 {offsets = [1, 0], sizes = [1, 128], strides = [1, 1]} : vector<2x128xf32> to vector<1x128xf32>
    %42 = vector.broadcast %40 : vector<64x1xf32> to vector<64x128xf32>
    %43 = vector.broadcast %41 : vector<1x128xf32> to vector<64x128xf32>
    %44 = arith.addf %42, %43 : vector<64x128xf32>
    %cst_17 = arith.constant 0.000000e+00 : f32
    %45 = vector.broadcast %cst_17 : f32 to vector<64x128xf32>
    %46 = arith.cmpf ogt, %44, %45 : vector<64x128xf32>
    %cst_18 = arith.constant 2.000000e-01 : f32
    %47 = vector.broadcast %cst_18 : f32 to vector<64x128xf32>
    %48 = arith.mulf %47, %44 : vector<64x128xf32>
    %49 = arith.select %46, %44, %48 : vector<64x128xi1>, vector<64x128xf32>
    %cst_19 = arith.constant -1.000000e+30 : f32
    %50 = vector.broadcast %cst_19 : f32 to vector<64x128xf32>
    %51 = arith.select %2, %49, %50 : vector<64x128xi1>, vector<64x128xf32>
    %cst_20 = arith.constant dense<0xFF800000> : vector<64xf32>
    %52 = vector.multi_reduction <maximumf>, %51, %cst_20 [1] : vector<64x128xf32> to vector<64xf32>
    %53 = vector.shape_cast %52 : vector<64xf32> to vector<64x1xf32>
    %54 = vector.broadcast %53 : vector<64x1xf32> to vector<64x128xf32>
    %55 = arith.subf %51, %54 : vector<64x128xf32>
    %56 = math.exp %55 : vector<64x128xf32>
    %cst_21 = arith.constant dense<0.000000e+00> : vector<64xf32>
    %57 = vector.multi_reduction <add>, %56, %cst_21 [1] : vector<64x128xf32> to vector<64xf32>
    %58 = vector.shape_cast %57 : vector<64xf32> to vector<64x1xf32>
    %59 = arith.truncf %56 : vector<64x128xf32> to vector<64x128xbf16>
    %60 = vector.extract_strided_slice %8 {offsets = [0, 32], sizes = [128, 32], strides = [1, 1]} : vector<128x64xbf16> to vector<128x32xbf16>
    %cst_22 = arith.constant dense<0.000000e+00> : vector<64x32xf32>
    %61 = tpu.matmul %59, %60, %cst_22 {dimension_numbers = #tpu.dot_dimension_numbers<[1], [0], [0], [1], [0, 0, 1, 1], [], []>} : vector<64x128xbf16>, vector<128x32xbf16>, vector<64x32xf32> -> vector<64x32xf32>
    %62 = tpu.reciprocal %58 {approx = true} : vector<64x1xf32> -> vector<64x1xf32>
    %63 = vector.broadcast %62 : vector<64x1xf32> to vector<64x32xf32>
    %64 = arith.mulf %61, %63 : vector<64x32xf32>
    %c0_23 = arith.constant 0 : index
    %c0_24 = arith.constant 0 : index
    %65 = vector.load %arg6[%c0_23, %c0_24] : memref<1x64xf32, #tpu.memory_space<vmem>>, vector<1x64xf32>
    %66 = tpu.concatenate %39, %64 in 1 : vector<64x32xf32>, vector<64x32xf32> -> vector<64x64xf32>
    %67 = vector.broadcast %65 : vector<1x64xf32> to vector<64x64xf32>
    %68 = arith.addf %66, %67 : vector<64x64xf32>
    %cst_25 = arith.constant 0.000000e+00 : f32
    %69 = vector.broadcast %cst_25 : f32 to vector<64x64xf32>
    %70 = arith.maximumf %68, %69 : vector<64x64xf32>
    %c0_26 = arith.constant 0 : index
    %c0_27 = arith.constant 0 : index
    %71 = vector.load %arg7[%c0_26, %c0_27] : memref<64x64xf32, #tpu.memory_space<vmem>>, vector<64x64xf32>
    tpu.vector_store %arg7[%c0_26, %c0_27], %70 {strides = array<i32>} : memref<64x64xf32, #tpu.memory_space<vmem>>, vector<64x64xf32>,
    return
  }
  func.func @transform_0(%arg0: i32) -> (i32, i32) {
    %c0_i32 = arith.constant 0 : i32
    %c0_i32_0 = arith.constant 0 : i32
    return %arg0, %c0_i32 : i32, i32
  }
  func.func @transform_1(%arg0: i32) -> (i32, i32) {
    %c0_i32 = arith.constant 0 : i32
    %c0_i32_0 = arith.constant 0 : i32
    %c0_i32_1 = arith.constant 0 : i32
    return %c0_i32, %c0_i32_0 : i32, i32
  }
  func.func @transform_2(%arg0: i32) -> (i32, i32) {
    %c0_i32 = arith.constant 0 : i32
    %c0_i32_0 = arith.constant 0 : i32
    return %arg0, %c0_i32 : i32, i32
  }
  func.func @transform_3(%arg0: i32) -> (i32, i32) {
    %c0_i32 = arith.constant 0 : i32
    %c0_i32_0 = arith.constant 0 : i32
    %c0_i32_1 = arith.constant 0 : i32
    return %c0_i32, %c0_i32_0 : i32, i32
  }
  func.func @transform_4(%arg0: i32) -> (i32, i32) {
    %c0_i32 = arith.constant 0 : i32
    %c0_i32_0 = arith.constant 0 : i32
    %c0_i32_1 = arith.constant 0 : i32
    return %c0_i32, %c0_i32_0 : i32, i32
  }
  func.func @transform_5(%arg0: i32) -> (i32, i32) {
    %c0_i32 = arith.constant 0 : i32
    %c0_i32_0 = arith.constant 0 : i32
    %c0_i32_1 = arith.constant 0 : i32
    return %c0_i32, %c0_i32_0 : i32, i32
  }
  func.func @transform_6(%arg0: i32) -> (i32, i32) {
    %c0_i32 = arith.constant 0 : i32
    %c0_i32_0 = arith.constant 0 : i32
    return %arg0, %c0_i32 : i32, i32
  }
}

</mosaic_0001>

<llo_original>
// kernel: tpu_custom_call.1
$region0: #{tpu_custom_call.1}
  #allocation0 [shape = 'u32[]', space=smem, size = 0x4, offset = 0x4, fixed_abs, tag = 'smem constant byte address 0x4 - core index']
  #allocation1 [shape = 'u32[144,128]{1,0:T(1,128)}', space=vmem, size = 0x12000, scoped, tag = 'internal scratch']
  %s0 = inlined_call_operand.vmem [shape: bf16[128,128], index: 0, kind: input, shape index: {}]
  %s1 = inlined_call_operand.vmem [shape: f32[128,32], index: 1, kind: input, shape index: {}]
  %s2 = inlined_call_operand.vmem [shape: f32[128,32], index: 2, kind: input, shape index: {}]
  %s3 = inlined_call_operand.vmem [shape: bf16[32,66], index: 3, kind: input, shape index: {}]
  %s4 = inlined_call_operand.vmem [shape: bf16[32,2], index: 4, kind: input, shape index: {}]
  %s5 = inlined_call_operand.vmem [shape: f32[1,64], index: 5, kind: input, shape index: {}]
  %s6 = inlined_call_operand.vmem [shape: f32[128,64], index: 6, kind: output, shape index: {}]
  %s7 = sld [smem:[#allocation0]]
  $region57: #{tpu_custom_call.1} parent=0
    _
  %s9 = ssub.s32 1, %s7
  %s10 = scalar_select 0, %s9, %s7
  loop: start=0, step=1, limit=4
  $region2: #{tpu_custom_call.1} parent=0 // loop_pre_header
    _
  $region3: #{tpu_custom_call.1} parent=0 // loop_header
    %s12 = sphi 0, %s16
    %p13 = scmp.ge.s32.totalorder %s12, 4
    %s22 = sphi 0, %s24
    %s25 = sphi 0, %s22
    %s26 = sphi 0, %s25
    %s42 = sphi 0, %s26
    %s46 = sphi 0, %s46
    %s48 = sphi 0, %s46
    %s49 = sphi 0, %s48
    %s63 = sphi 0, %s49
    %s69 = sphi 0, %s71
    %s72 = sphi 0, %s69
    %s73 = sphi 0, %s72
    %s89 = sphi 0, %s73
    %s93 = sphi 0, %s93
    %s95 = sphi 0, %s93
    %s96 = sphi 0, %s95
    %s110 = sphi 0, %s96
    %s114 = sphi 0, %s114
    %s116 = sphi 0, %s114
    %s117 = sphi 0, %s116
    %s131 = sphi 0, %s117
    %s135 = sphi 0, %s135
    %s137 = sphi 0, %s135
    %s138 = sphi 0, %s137
    %s152 = sphi 0, %s138
    %s158 = sphi 0, %s160
    %s161 = sphi 0, %s158
    %s162 = sphi 0, %s161
    %s178 = sphi 0, %s162
  $region4: #{tpu_custom_call.1} parent=0 // loop_header_branch
    %15 = sbr.rel (%p13) target = $region8
  $region5: #{tpu_custom_call.1} parent=0 // loop_body
    %s17 = ssub.s32 %s12, 1
    %s18 = ssub.s32 %s12, 2
    %s19 = sadd.s32 %s12, 1
    %s20 = ssub.s32 %s12, %s19
    %p21 = scmp.eq.s32.totalorder %s20, 0
    %s23 = sadd.s32 %s22, 1
    %s24 = scalar_select %p21, %s22, %s23
    %p27 = pneg %p21
    %p28 = scmp.eq.s32.totalorder %s12, 1
    %p29 = por %p27, %p28
    %p30 = scmp.ne.s32.totalorder %s22, %s25
    %p31 = scmp.eq.s32.totalorder %s12, 0
    %p32 = por %p30, %p31
    %p33 = scmp.ne.s32.totalorder %s22, %s25
    %p34 = scmp.eq.s32.totalorder %s17, 1
    %p35 = por %p33, %p34
    %p36 = scmp.ne.s32.totalorder %s25, %s26
    %p37 = scmp.eq.s32.totalorder %s17, 0
    %p38 = por %p36, %p37
    %p39 = scmp.ne.s32.totalorder %s25, %s26
    %p40 = scmp.eq.s32.totalorder %s18, 1
    %p41 = por %p39, %p40
    %p43 = scmp.ne.s32.totalorder %s26, %s42
    %p44 = scmp.eq.s32.totalorder %s18, 0
    %p45 = por %p43, %p44
    %s47 = sadd.s32 %s46, 1
    %p50 = scmp.eq.s32.totalorder %s12, 1
    %p51 = scmp.ne.s32.totalorder %s46, %s48
    %p52 = scmp.eq.s32.totalorder %s12, 0
    %p53 = por %p51, %p52
    %p54 = scmp.ne.s32.totalorder %s46, %s48
    %p55 = scmp.eq.s32.totalorder %s17, 1
    %p56 = por %p54, %p55
    %p57 = scmp.ne.s32.totalorder %s48, %s49
    %p58 = scmp.eq.s32.totalorder %s17, 0
    %p59 = por %p57, %p58
    %p60 = scmp.ne.s32.totalorder %s48, %s49
    %p61 = scmp.eq.s32.totalorder %s18, 1
    %p62 = por %p60, %p61
    %p64 = scmp.ne.s32.totalorder %s49, %s63
    %p65 = scmp.eq.s32.totalorder %s18, 0
    %p66 = por %p64, %p65
    %s67 = ssub.s32 %s12, %s19
    %p68 = scmp.eq.s32.totalorder %s67, 0
    %s70 = sadd.s32 %s69, 1
    %s71 = scalar_select %p68, %s69, %s70
    %p74 = pneg %p68
    %p75 = scmp.eq.s32.totalorder %s12, 1
    %p76 = por %p74, %p75
    %p77 = scmp.ne.s32.totalorder %s69, %s72
    %p78 = scmp.eq.s32.totalorder %s12, 0
    %p79 = por %p77, %p78
    %p80 = scmp.ne.s32.totalorder %s69, %s72
    %p81 = scmp.eq.s32.totalorder %s17, 1
    %p82 = por %p80, %p81
    %p83 = scmp.ne.s32.totalorder %s72, %s73
    %p84 = scmp.eq.s32.totalorder %s17, 0
    %p85 = por %p83, %p84
    %p86 = scmp.ne.s32.totalorder %s72, %s73
    %p87 = scmp.eq.s32.totalorder %s18, 1
    %p88 = por %p86, %p87
    %p90 = scmp.ne.s32.totalorder %s73, %s89
    %p91 = scmp.eq.s32.totalorder %s18, 0
    %p92 = por %p90, %p91
    %s94 = sadd.s32 %s93, 1
    %p97 = scmp.eq.s32.totalorder %s12, 1
    %p98 = scmp.ne.s32.totalorder %s93, %s95
    %p99 = scmp.eq.s32.totalorder %s12, 0
    %p100 = por %p98, %p99
    %p101 = scmp.ne.s32.totalorder %s93, %s95
    %p102 = scmp.eq.s32.totalorder %s17, 1
    %p103 = por %p101, %p102
    %p104 = scmp.ne.s32.totalorder %s95, %s96
    %p105 = scmp.eq.s32.totalorder %s17, 0
    %p106 = por %p104, %p105
    %p107 = scmp.ne.s32.totalorder %s95, %s96
    %p108 = scmp.eq.s32.totalorder %s18, 1
    %p109 = por %p107, %p108
    %p111 = scmp.ne.s32.totalorder %s96, %s110
    %p112 = scmp.eq.s32.totalorder %s18, 0
    %p113 = por %p111, %p112
    %s115 = sadd.s32 %s114, 1
    %p118 = scmp.eq.s32.totalorder %s12, 1
    %p119 = scmp.ne.s32.totalorder %s114, %s116
    %p120 = scmp.eq.s32.totalorder %s12, 0
    %p121 = por %p119, %p120
    %p122 = scmp.ne.s32.totalorder %s114, %s116
    %p123 = scmp.eq.s32.totalorder %s17, 1
    %p124 = por %p122, %p123
    %p125 = scmp.ne.s32.totalorder %s116, %s117
    %p126 = scmp.eq.s32.totalorder %s17, 0
    %p127 = por %p125, %p126
    %p128 = scmp.ne.s32.totalorder %s116, %s117
    %p129 = scmp.eq.s32.totalorder %s18, 1
    %p130 = por %p128, %p129
    %p132 = scmp.ne.s32.totalorder %s117, %s131
    %p133 = scmp.eq.s32.totalorder %s18, 0
    %p134 = por %p132, %p133
    %s136 = sadd.s32 %s135, 1
    %p139 = scmp.eq.s32.totalorder %s12, 1
    %p140 = scmp.ne.s32.totalorder %s135, %s137
    %p141 = scmp.eq.s32.totalorder %s12, 0
    %p142 = por %p140, %p141
    %p143 = scmp.ne.s32.totalorder %s135, %s137
    %p144 = scmp.eq.s32.totalorder %s17, 1
    %p145 = por %p143, %p144
    %p146 = scmp.ne.s32.totalorder %s137, %s138
    %p147 = scmp.eq.s32.totalorder %s17, 0
    %p148 = por %p146, %p147
    %p149 = scmp.ne.s32.totalorder %s137, %s138
    %p150 = scmp.eq.s32.totalorder %s18, 1
    %p151 = por %p149, %p150
    %p153 = scmp.ne.s32.totalorder %s138, %s152
    %p154 = scmp.eq.s32.totalorder %s18, 0
    %p155 = por %p153, %p154
    %s156 = ssub.s32 %s12, %s19
    %p157 = scmp.eq.s32.totalorder %s156, 0
    %s159 = sadd.s32 %s158, 1
    %s160 = scalar_select %p157, %s158, %s159
    %p163 = pneg %p157
    %p164 = scmp.eq.s32.totalorder %s12, 1
    %p165 = por %p163, %p164
    %p166 = scmp.ne.s32.totalorder %s158, %s161
    %p167 = scmp.eq.s32.totalorder %s12, 0
    %p168 = por %p166, %p167
    %p169 = scmp.ne.s32.totalorder %s158, %s161
    %p170 = scmp.eq.s32.totalorder %s17, 1
    %p171 = por %p169, %p170
    %p172 = scmp.ne.s32.totalorder %s161, %s162
    %p173 = scmp.eq.s32.totalorder %s17, 0
    %p174 = por %p172, %p173
    %p175 = scmp.ne.s32.totalorder %s161, %s162
    %p176 = scmp.eq.s32.totalorder %s18, 1
    %p177 = por %p175, %p176
    %p179 = scmp.ne.s32.totalorder %s162, %s178
    %p180 = scmp.eq.s32.totalorder %s18, 0
    %p181 = por %p179, %p180
    %p182 = scmp.le.s32.totalorder 1, %s12
    %p183 = scmp.lt.s32.totalorder %s12, 3
    %p184 = pnand %p182, %p183
    %p185 = pneg %p184
    // Predicated region
    $region9: #{tpu_custom_call.1} parent=5 // pred_check
      _
    $region10: #{tpu_custom_call.1} parent=5 // pred_check_branch
      %187 = sbr.rel (%p184) target = $region12
    $region11: #{tpu_custom_call.1} parent=5 // pred_region
      %s188 = ssub.s32 %s12, 1
      // Predicated region
      $region13: #{tpu_custom_call.1} parent=11 // pred_check
        %p189 = pneg %p59
      $region14: #{tpu_custom_call.1} parent=11 // pred_check_branch
        %191 = sbr.rel (%p189) target = $region16
      $region15: #{tpu_custom_call.1} parent=11 // pred_region
        _
      $region16: #{tpu_custom_call.1} parent=11 // pred_fallthru
        _
      // Predicated region
      $region17: #{tpu_custom_call.1} parent=11 // pred_check
        %p192 = pneg %p106
      $region18: #{tpu_custom_call.1} parent=11 // pred_check_branch
        %194 = sbr.rel (%p192) target = $region20
      $region19: #{tpu_custom_call.1} parent=11 // pred_region
        _
      $region20: #{tpu_custom_call.1} parent=11 // pred_fallthru
        _
      // Predicated region
      $region21: #{tpu_custom_call.1} parent=11 // pred_check
        %p195 = pneg %p127
      $region22: #{tpu_custom_call.1} parent=11 // pred_check_branch
        %197 = sbr.rel (%p195) target = $region24
      $region23: #{tpu_custom_call.1} parent=11 // pred_region
        _
      $region24: #{tpu_custom_call.1} parent=11 // pred_fallthru
        _
      // Predicated region
      $region25: #{tpu_custom_call.1} parent=11 // pred_check
        %p198 = pneg %p148
      $region26: #{tpu_custom_call.1} parent=11 // pred_check_branch
        %200 = sbr.rel (%p198) target = $region28
      $region27: #{tpu_custom_call.1} parent=11 // pred_region
        _
      $region28: #{tpu_custom_call.1} parent=11 // pred_fallthru
        _
    $region12: #{tpu_custom_call.1} parent=5 // pred_fallthru
      _
    %p201 = scmp.lt.s32.totalorder %s12, 2
    // Predicated region
    $region29: #{tpu_custom_call.1} parent=5 // pred_check
      %p202 = pneg %p201
    $region30: #{tpu_custom_call.1} parent=5 // pred_check_branch
      %204 = sbr.rel (%p202) target = $region32
    $region31: #{tpu_custom_call.1} parent=5 // pred_region
      // Predicated region
      $region33: #{tpu_custom_call.1} parent=31 // pred_check
        %p205 = pneg %p32
      $region34: #{tpu_custom_call.1} parent=31 // pred_check_branch
        %207 = sbr.rel (%p205) target = $region36
      $region35: #{tpu_custom_call.1} parent=31 // pred_region
        %s208 = smul.u32 8, %s12
        %p209 = scmp.lt.s32.totalorder %s208, 15
        %s210 = scalar_select %p209, %s208, 15
        %s211 = smul.addr %s210, 4
        %s212 = scalar_lea.vmem %s0, %s211
        %s213 = smul.u32 8, %s12
      $region36: #{tpu_custom_call.1} parent=31 // pred_fallthru
        _
      // Predicated region
      $region37: #{tpu_custom_call.1} parent=31 // pred_check
        %p214 = pneg %p79
      $region38: #{tpu_custom_call.1} parent=31 // pred_check_branch
        %216 = sbr.rel (%p214) target = $region40
      $region39: #{tpu_custom_call.1} parent=31 // pred_region
        %s217 = smul.u32 8, %s12
        %p218 = scmp.lt.s32.totalorder %s217, 15
        %s219 = scalar_select %p218, %s217, 15
        %s220 = smul.addr %s219, 8
        %s221 = scalar_lea.vmem %s2, %s220
        %s222 = smul.u32 8, %s12
      $region40: #{tpu_custom_call.1} parent=31 // pred_fallthru
        _
    $region32: #{tpu_custom_call.1} parent=5 // pred_fallthru
      _
    %p223 = scmp.le.s32.totalorder 1, %s12
    %p224 = scmp.lt.s32.totalorder %s12, 3
    %p225 = pnand %p223, %p224
    %p226 = pneg %p225
    // Predicated region
    $region41: #{tpu_custom_call.1} parent=5 // pred_check
      _
    $region42: #{tpu_custom_call.1} parent=5 // pred_check_branch
      %228 = sbr.rel (%p225) target = $region44
    $region43: #{tpu_custom_call.1} parent=5 // pred_region
      %s229 = ssub.s32 %s12, 1
      %s230 = smul.u32 8, %s17
      %p231 = scmp.lt.s32.totalorder %s230, 15
      %s232 = scalar_select %p231, %s230, 15
      %s233 = smul.addr %s232, 4
      %s234 = scalar_lea.vmem %s0, %s233
      %p235 = pneg %p38
      %p236 = pneg %p35
      %p237 = pneg %p59
      %p238 = pneg %p56
      %s239 = smul.u32 8, %s17
      %p240 = scmp.lt.s32.totalorder %s239, 15
      %s241 = scalar_select %p240, %s239, 15
      %s242 = smul.addr %s241, 8
      %s243 = scalar_lea.vmem %s2, %s242
      %p244 = pneg %p85
      %p245 = pneg %p82
      %p246 = pneg %p106
      %p247 = pneg %p103
      %p248 = pneg %p127
      %p249 = pneg %p124
      %p250 = pneg %p148
      %p251 = pneg %p145
      %p252 = pneg %p174
      %p253 = pneg %p171
      %s254 = smul.u32 8, %s17
      %p255 = scmp.lt.s32.totalorder %s254, 15
      %s256 = scalar_select %p255, %s254, 15
      %s257 = smul.addr %s256, 8
      %s258 = scalar_lea.vmem %s6, %s257
      %s259 = smul.u32 8, %s17
      %p260 = scmp.lt.s32.totalorder %s259, 15
      %s261 = scalar_select %p260, %s259, 15
      %s262 = smul.addr %s261, 4
      %s263 = scalar_lea.vmem %s0, %s262
      %s264 = smul.u32 8, %s17
      %s265 = smul.u32 8, %s17
      %p266 = scmp.lt.s32.totalorder %s265, 15
      %s267 = scalar_select %p266, %s265, 15
      %s268 = smul.addr %s267, 8
      %s269 = scalar_lea.vmem %s2, %s268
      %s270 = smul.u32 8, %s17
      %s271 = smul.u32 8, %s17
      %p272 = scmp.lt.s32.totalorder %s271, 15
      %s273 = scalar_select %p272, %s271, 15
      %s274 = smul.addr %s273, 8
      %s275 = scalar_lea.vmem %s6, %s274
      %s276 = smul.u32 8, %s17
      %v280 = vld [vmem:[%s263] sm:$0xf]
      %v281 = vld [vmem:[%s263 + $0x4] sm:$0xf]
      %v282 = vld [vmem:[%s263 + $0x8] sm:$0xf]
      %v283 = vld [vmem:[%s263 + $0xc] sm:$0xf]
      %v284 = vld [vmem:[%s263 + $0x10] sm:$0xf]
      %v285 = vld [vmem:[%s263 + $0x14] sm:$0xf]
      %v286 = vld [vmem:[%s263 + $0x18] sm:$0xf]
      %v287 = vld [vmem:[%s263 + $0x1c] sm:$0xf]
      %vm288 = vcmp.gt.bf16.partialorder %v280, 0
      %vm289 = vcmp.gt.bf16.partialorder %v281, 0
      %vm290 = vcmp.gt.bf16.partialorder %v282, 0
      %vm291 = vcmp.gt.bf16.partialorder %v283, 0
      %vm292 = vcmp.gt.bf16.partialorder %v284, 0
      %vm293 = vcmp.gt.bf16.partialorder %v285, 0
      %vm294 = vcmp.gt.bf16.partialorder %v286, 0
      %vm295 = vcmp.gt.bf16.partialorder %v287, 0
      %v296 = vld [vmem:[%s1] sm:$0xff]
      %v297 = vld [vmem:[%s1 + $0x8] sm:$0xff]
      %v298 = vld [vmem:[%s1 + $0x10] sm:$0xff]
      %v299 = vld [vmem:[%s1 + $0x18] sm:$0xff]
      %v300 = vld [vmem:[%s1 + $0x20] sm:$0xff]
      %v301 = vld [vmem:[%s1 + $0x28] sm:$0xff]
      %v302 = vld [vmem:[%s1 + $0x30] sm:$0xff]
      %v303 = vld [vmem:[%s1 + $0x38] sm:$0xff]
      %v304 = vld [vmem:[%s1 + $0x40] sm:$0xff]
      %v305 = vld [vmem:[%s1 + $0x48] sm:$0xff]
      %v306 = vld [vmem:[%s1 + $0x50] sm:$0xff]
      %v307 = vld [vmem:[%s1 + $0x58] sm:$0xff]
      %v308 = vld [vmem:[%s1 + $0x60] sm:$0xff]
      %v309 = vld [vmem:[%s1 + $0x68] sm:$0xff]
      %v310 = vld [vmem:[%s1 + $0x70] sm:$0xff]
      %v311 = vld [vmem:[%s1 + $0x78] sm:$0xff]
      %v312 = vpack.c.bf16 %v297, %v296
      %v313 = vpack.c.bf16 %v299, %v298
      %v314 = vpack.c.bf16 %v301, %v300
      %v315 = vpack.c.bf16 %v303, %v302
      %v316 = vpack.c.bf16 %v305, %v304
      %v317 = vpack.c.bf16 %v307, %v306
      %v318 = vpack.c.bf16 %v309, %v308
      %v319 = vpack.c.bf16 %v311, %v310
      %v320 = vld [vmem:[%s3] sm:$0xf]
      %v321 = vld [vmem:[%s3 + $0x4] sm:$0xf]
      %v322 = vld [vmem:[%s3 + $0x8] sm:$0xf]
      %v323 = vld [vmem:[%s3 + $0xc] sm:$0xf]
      %v328 = vunpack.c.l.b16 %v320
      %v329 = vunpack.c.l.b16 %v321
      %v330 = vunpack.c.l.b16 %v322
      %v331 = vunpack.c.l.b16 %v323
      %v332 = vpack.c.b16 %v329, %v328
      %v333 = vpack.c.b16 %v331, %v330
      %vm336 = vcmask 261120
      %v338 = vsel %vm336, %v312, 0
      %v341 = vsel %vm336, %v313, 0
      %v344 = vsel %vm336, %v314, 0
      %v347 = vsel %vm336, %v315, 0
      %v350 = vsel %vm336, %v316, 0
      %v353 = vsel %vm336, %v317, 0
      %v356 = vsel %vm336, %v318, 0
      %v359 = vsel %vm336, %v319, 0
      %361 = vmatprep.subr.bf16.mxu0 0
      %362 = vmatpush1.bf16.msra.mxu0 %v332
      %363 = vmatprep.subr.bf16.mxu0 0
      %364 = vmatpush1.bf16.msra.mxu0 %v333
      %365 = vmatprep.subr.bf16.mxu0 0
      %366 = vmatpush1.bf16.msra.mxu0 0
      %367 = vmatprep.subr.bf16.mxu0 0
      %368 = vmatpush1.bf16.msra.mxu0 0
      %369 = vmatprep.subr.bf16.mxu0 0
      %370 = vmatpush1.bf16.msra.mxu0 0
      %371 = vmatprep.subr.bf16.mxu0 0
      %372 = vmatpush1.bf16.msra.mxu0 0
      %373 = vmatprep.subr.bf16.mxu0 0
      %374 = vmatpush1.bf16.msra.mxu0 0
      %375 = vmatprep.subr.bf16.mxu0 0
      %376 = vmatpush1.bf16.msra.mxu0 0
      %377 = vmatprep.subr.bf16.mxu0 0
      %378 = vmatpush1.bf16.msra.mxu0 0
      %379 = vmatprep.subr.bf16.mxu0 0
      %380 = vmatpush1.bf16.msra.mxu0 0
      %381 = vmatprep.subr.bf16.mxu0 0
      %382 = vmatpush1.bf16.msra.mxu0 0
      %383 = vmatprep.subr.bf16.mxu0 0
      %384 = vmatpush1.bf16.msra.mxu0 0
      %385 = vmatprep.subr.bf16.mxu0 0
      %386 = vmatpush1.bf16.msra.mxu0 0
      %387 = vmatprep.subr.bf16.mxu0 0
      %388 = vmatpush1.bf16.msra.mxu0 0
      %389 = vmatprep.subr.bf16.mxu0 0
      %390 = vmatpush1.bf16.msra.mxu0 0
      %391 = vmatprep.subr.bf16.mxu0 0
      %392 = vmatpush1.bf16.msra.mxu0 0
      %393 = vmatprep.mubr.bf16.mxu0 0
      %394 = vmatmul.mubr.bf16.gmra.mrb[0].mxu0 %v338
      %v395 = vpop.f32.mrb[0].mxu0
      %v396 = vadd.f32 0.0, %v395
      %v397 = vpop.f32.mrb[0].mxu0
      %v398 = vpop.f32.mrb[0].mxu0
      %v399 = vadd.f32 0.0, %v398
      %v400 = vpop.f32.mrb[0].mxu0
      %401 = vmatprep.mubr.bf16.mxu0 0
      %402 = vmatmul.mubr.bf16.gmra.mrb[0].mxu0 %v341
      %v403 = vpop.f32.mrb[0].mxu0
      %v404 = vadd.f32 0.0, %v403
      %v405 = vpop.f32.mrb[0].mxu0
      %v406 = vpop.f32.mrb[0].mxu0
      %v407 = vadd.f32 0.0, %v406
      %v408 = vpop.f32.mrb[0].mxu0
      %409 = vmatprep.mubr.bf16.mxu0 0
      %410 = vmatmul.mubr.bf16.gmra.mrb[0].mxu0 %v344
      %v411 = vpop.f32.mrb[0].mxu0
      %v412 = vadd.f32 0.0, %v411
      %v413 = vpop.f32.mrb[0].mxu0
      %v414 = vpop.f32.mrb[0].mxu0
      %v415 = vadd.f32 0.0, %v414
      %v416 = vpop.f32.mrb[0].mxu0
      %417 = vmatprep.mubr.bf16.mxu0 0
      %418 = vmatmul.mubr.bf16.gmra.mrb[0].mxu0 %v347
      %v419 = vpop.f32.mrb[0].mxu0
      %v420 = vadd.f32 0.0, %v419
      %v421 = vpop.f32.mrb[0].mxu0
      %v422 = vpop.f32.mrb[0].mxu0
      %v423 = vadd.f32 0.0, %v422
      %v424 = vpop.f32.mrb[0].mxu0
      %425 = vmatprep.mubr.bf16.mxu0 0
      %426 = vmatmul.mubr.bf16.gmra.mrb[0].mxu0 %v350
      %v427 = vpop.f32.mrb[0].mxu0
      %v428 = vadd.f32 0.0, %v427
      %v429 = vpop.f32.mrb[0].mxu0
      %v430 = vpop.f32.mrb[0].mxu0
      %v431 = vadd.f32 0.0, %v430
      %v432 = vpop.f32.mrb[0].mxu0
      %433 = vmatprep.mubr.bf16.mxu0 0
      %434 = vmatmul.mubr.bf16.gmra.mrb[0].mxu0 %v353
      %v435 = vpop.f32.mrb[0].mxu0
      %v436 = vadd.f32 0.0, %v435
      %v437 = vpop.f32.mrb[0].mxu0
      %v438 = vpop.f32.mrb[0].mxu0
      %v439 = vadd.f32 0.0, %v438
      %v440 = vpop.f32.mrb[0].mxu0
      %441 = vmatprep.mubr.bf16.mxu0 0
      %442 = vmatmul.mubr.bf16.gmra.mrb[0].mxu0 %v356
      %v443 = vpop.f32.mrb[0].mxu0
      %v444 = vadd.f32 0.0, %v443
      %v445 = vpop.f32.mrb[0].mxu0
      %v446 = vpop.f32.mrb[0].mxu0
      %v447 = vadd.f32 0.0, %v446
      %v448 = vpop.f32.mrb[0].mxu0
      %449 = vmatprep.mubr.bf16.mxu0 0
      %450 = vmatmul.mubr.bf16.gmra.mrb[0].mxu0 %v359
      %v451 = vpop.f32.mrb[0].mxu0
      %v452 = vadd.f32 0.0, %v451
      %v453 = vpop.f32.mrb[0].mxu0
      %v454 = vpop.f32.mrb[0].mxu0
      %v455 = vadd.f32 0.0, %v454
      %v456 = vpop.f32.mrb[0].mxu0
      %457 = vdwg.mxu0
      %v458 = vpack.c.bf16 %v399, %v396
      %v459 = vpack.c.bf16 %v407, %v404
      %v460 = vpack.c.bf16 %v415, %v412
      %v461 = vpack.c.bf16 %v423, %v420
      %v462 = vpack.c.bf16 %v431, %v428
      %v463 = vpack.c.bf16 %v439, %v436
      %v464 = vpack.c.bf16 %v447, %v444
      %v465 = vpack.c.bf16 %v455, %v452
      %482 = vrot.lane.b32.xlu0 %v396, 64
      %v483 = vpop.permute.xlu0 %482
      %484 = vrot.lane.b32.xlu0 %v399, 64
      %v485 = vpop.permute.xlu0 %484
      %486 = vrot.lane.b32.xlu0 %v404, 64
      %v487 = vpop.permute.xlu0 %486
      %488 = vrot.lane.b32.xlu0 %v407, 64
      %v489 = vpop.permute.xlu0 %488
      %490 = vrot.lane.b32.xlu0 %v412, 64
      %v491 = vpop.permute.xlu0 %490
      %492 = vrot.lane.b32.xlu0 %v415, 64
      %v493 = vpop.permute.xlu0 %492
      %494 = vrot.lane.b32.xlu0 %v420, 64
      %v495 = vpop.permute.xlu0 %494
      %496 = vrot.lane.b32.xlu0 %v423, 64
      %v497 = vpop.permute.xlu0 %496
      %498 = vrot.lane.b32.xlu0 %v428, 64
      %v499 = vpop.permute.xlu0 %498
      %500 = vrot.lane.b32.xlu0 %v431, 64
      %v501 = vpop.permute.xlu0 %500
      %502 = vrot.lane.b32.xlu0 %v436, 64
      %v503 = vpop.permute.xlu0 %502
      %504 = vrot.lane.b32.xlu0 %v439, 64
      %v505 = vpop.permute.xlu0 %504
      %506 = vrot.lane.b32.xlu0 %v444, 64
      %v507 = vpop.permute.xlu0 %506
      %508 = vrot.lane.b32.xlu0 %v447, 64
      %v509 = vpop.permute.xlu0 %508
      %510 = vrot.lane.b32.xlu0 %v452, 64
      %v511 = vpop.permute.xlu0 %510
      %512 = vrot.lane.b32.xlu0 %v455, 64
      %v513 = vpop.permute.xlu0 %512
      %530 = vxpose.xlu0.b32.start [1/16] %v483, 128
      %531 = vxpose.xlu0.b32.cont [2/16] %v485, 128
      %532 = vxpose.xlu0.b32.cont [3/16] %v487, 128
      %533 = vxpose.xlu0.b32.cont [4/16] %v489, 128
      %534 = vxpose.xlu0.b32.cont [5/16] %v491, 128
      %535 = vxpose.xlu0.b32.cont [6/16] %v493, 128
      %536 = vxpose.xlu0.b32.cont [7/16] %v495, 128
      %537 = vxpose.xlu0.b32.cont [8/16] %v497, 128
      %538 = vxpose.xlu0.b32.cont [9/16] %v499, 128
      %539 = vxpose.xlu0.b32.cont [10/16] %v501, 128
      %540 = vxpose.xlu0.b32.cont [11/16] %v503, 128
      %541 = vxpose.xlu0.b32.cont [12/16] %v505, 128
      %542 = vxpose.xlu0.b32.cont [13/16] %v507, 128
      %543 = vxpose.xlu0.b32.cont [14/16] %v509, 128
      %544 = vxpose.xlu0.b32.cont [15/16] %v511, 128
      %545 = vxpose.xlu0.b32.end [16/16] %v513, 128
      %v546 = vpop.trf.xlu0
      %v547 = vpop.trf.xlu0
      %v548 = vpop.trf.xlu0
      %v549 = vpop.trf.xlu0
      %v550 = vpop.trf.xlu0
      %v551 = vpop.trf.xlu0
      %v552 = vpop.trf.xlu0
      %v553 = vpop.trf.xlu0
      %v554 = vpop.trf.xlu0
      %v555 = vpop.trf.xlu0
      %v556 = vpop.trf.xlu0
      %v557 = vpop.trf.xlu0
      %v558 = vpop.trf.xlu0
      %v559 = vpop.trf.xlu0
      %v560 = vpop.trf.xlu0
      %v561 = vpop.trf.xlu0
      %v562 = vld [vmem:[%s269] sm:$0xff]
      %v563 = vld [vmem:[%s269 + $0x8] sm:$0xff]
      %v564 = vld [vmem:[%s269 + $0x10] sm:$0xff]
      %v565 = vld [vmem:[%s269 + $0x18] sm:$0xff]
      %v566 = vld [vmem:[%s269 + $0x20] sm:$0xff]
      %v567 = vld [vmem:[%s269 + $0x28] sm:$0xff]
      %v568 = vld [vmem:[%s269 + $0x30] sm:$0xff]
      %v569 = vld [vmem:[%s269 + $0x38] sm:$0xff]
      %v570 = vpack.c.bf16 %v563, %v562
      %v571 = vpack.c.bf16 %v565, %v564
      %v572 = vpack.c.bf16 %v567, %v566
      %v573 = vpack.c.bf16 %v569, %v568
      %v574 = vld [vmem:[%s4] sm:$0xf]
      %v575 = vld [vmem:[%s4 + $0x4] sm:$0xf]
      %v576 = vld [vmem:[%s4 + $0x8] sm:$0xf]
      %v577 = vld [vmem:[%s4 + $0xc] sm:$0xf]
      %v582 = vunpack.c.l.b16 %v574
      %v583 = vunpack.c.l.b16 %v575
      %v584 = vunpack.c.l.b16 %v576
      %v585 = vunpack.c.l.b16 %v577
      %v586 = vpack.c.b16 %v583, %v582
      %v587 = vpack.c.b16 %v585, %v584
      %v591 = vsel %vm336, %v570, 0
      %v594 = vsel %vm336, %v571, 0
      %v597 = vsel %vm336, %v572, 0
      %v600 = vsel %vm336, %v573, 0
      %602 = vmatprep.subr.bf16.mxu0 0
      %603 = vmatpush1.bf16.msra.mxu0 %v586
      %604 = vmatprep.subr.bf16.mxu0 0
      %605 = vmatpush1.bf16.msra.mxu0 %v587
      %606 = vmatprep.subr.bf16.mxu0 0
      %607 = vmatpush1.bf16.msra.mxu0 0
      %608 = vmatprep.subr.bf16.mxu0 0
      %609 = vmatpush1.bf16.msra.mxu0 0
      %610 = vmatprep.subr.bf16.mxu0 0
      %611 = vmatpush1.bf16.msra.mxu0 0
      %612 = vmatprep.subr.bf16.mxu0 0
      %613 = vmatpush1.bf16.msra.mxu0 0
      %614 = vmatprep.subr.bf16.mxu0 0
      %615 = vmatpush1.bf16.msra.mxu0 0
      %616 = vmatprep.subr.bf16.mxu0 0
      %617 = vmatpush1.bf16.msra.mxu0 0
      %618 = vmatprep.subr.bf16.mxu0 0
      %619 = vmatpush1.bf16.msra.mxu0 0
      %620 = vmatprep.subr.bf16.mxu0 0
      %621 = vmatpush1.bf16.msra.mxu0 0
      %622 = vmatprep.subr.bf16.mxu0 0
      %623 = vmatpush1.bf16.msra.mxu0 0
      %624 = vmatprep.subr.bf16.mxu0 0
      %625 = vmatpush1.bf16.msra.mxu0 0
      %626 = vmatprep.subr.bf16.mxu0 0
      %627 = vmatpush1.bf16.msra.mxu0 0
      %628 = vmatprep.subr.bf16.mxu0 0
      %629 = vmatpush1.bf16.msra.mxu0 0
      %630 = vmatprep.subr.bf16.mxu0 0
      %631 = vmatpush1.bf16.msra.mxu0 0
      %632 = vmatprep.subr.bf16.mxu0 0
      %633 = vmatpush1.bf16.msra.mxu0 0
      %634 = vmatprep.mubr.bf16.mxu0 0
      %635 = vmatmul.mubr.bf16.gmra.mrb[0].mxu0 %v591
      %v636 = vpop.f32.mrb[0].mxu0
      %v637 = vadd.f32 0.0, %v636
      %v638 = vpop.f32.mrb[0].mxu0
      %v639 = vpop.f32.mrb[0].mxu0
      %v640 = vadd.f32 0.0, %v639
      %v641 = vpop.f32.mrb[0].mxu0
      %642 = vmatprep.mubr.bf16.mxu0 0
      %643 = vmatmul.mubr.bf16.gmra.mrb[0].mxu0 %v594
      %v644 = vpop.f32.mrb[0].mxu0
      %v645 = vadd.f32 0.0, %v644
      %v646 = vpop.f32.mrb[0].mxu0
      %v647 = vpop.f32.mrb[0].mxu0
      %v648 = vadd.f32 0.0, %v647
      %v649 = vpop.f32.mrb[0].mxu0
      %650 = vmatprep.mubr.bf16.mxu0 0
      %651 = vmatmul.mubr.bf16.gmra.mrb[0].mxu0 %v597
      %v652 = vpop.f32.mrb[0].mxu0
      %v653 = vadd.f32 0.0, %v652
      %v654 = vpop.f32.mrb[0].mxu0
      %v655 = vpop.f32.mrb[0].mxu0
      %v656 = vadd.f32 0.0, %v655
      %v657 = vpop.f32.mrb[0].mxu0
      %658 = vmatprep.mubr.bf16.mxu0 0
      %659 = vmatmul.mubr.bf16.gmra.mrb[0].mxu0 %v600
      %v660 = vpop.f32.mrb[0].mxu0
      %v661 = vadd.f32 0.0, %v660
      %v662 = vpop.f32.mrb[0].mxu0
      %v663 = vpop.f32.mrb[0].mxu0
      %v664 = vadd.f32 0.0, %v663
      %v665 = vpop.f32.mrb[0].mxu0
      %666 = vdwg.mxu0
      %668 = vset.pattern.permute.xlu0 0
      %669 = vperm.xlu0 %668, %v637
      %v670 = vpop.permute.xlu0 %669
      %673 = vset.pattern.permute.xlu0 0
      %674 = vperm.xlu0 %673, %v640
      %v675 = vpop.permute.xlu0 %674
      %678 = vset.pattern.permute.xlu0 0
      %679 = vperm.xlu0 %678, %v645
      %v680 = vpop.permute.xlu0 %679
      %683 = vset.pattern.permute.xlu0 0
      %684 = vperm.xlu0 %683, %v648
      %v685 = vpop.permute.xlu0 %684
      %688 = vset.pattern.permute.xlu0 0
      %689 = vperm.xlu0 %688, %v653
      %v690 = vpop.permute.xlu0 %689
      %693 = vset.pattern.permute.xlu0 0
      %694 = vperm.xlu0 %693, %v656
      %v695 = vpop.permute.xlu0 %694
      %698 = vset.pattern.permute.xlu0 0
      %699 = vperm.xlu0 %698, %v661
      %v700 = vpop.permute.xlu0 %699
      %703 = vset.pattern.permute.xlu0 0
      %704 = vperm.xlu0 %703, %v664
      %v705 = vpop.permute.xlu0 %704
      %v707 = vlaneseq
      %v708 = vshrl.u32 %v707, 7
      %v709 = vsub.s32 0, %v708
      %v710 = vrot.slane %v546, %v709
      %v711 = vadd.f32 %v670, %v710
      %v712 = vadd.f32 %v675, %v710
      %v713 = vadd.f32 %v680, %v710
      %v714 = vadd.f32 %v685, %v710
      %v715 = vadd.f32 %v690, %v710
      %v716 = vadd.f32 %v695, %v710
      %v717 = vadd.f32 %v700, %v710
      %v718 = vadd.f32 %v705, %v710
      %vm719 = vcmp.gt.f32.partialorder %v711, 0.0
      %vm720 = vcmp.gt.f32.partialorder %v712, 0.0
      %vm721 = vcmp.gt.f32.partialorder %v713, 0.0
      %vm722 = vcmp.gt.f32.partialorder %v714, 0.0
      %vm723 = vcmp.gt.f32.partialorder %v715, 0.0
      %vm724 = vcmp.gt.f32.partialorder %v716, 0.0
      %vm725 = vcmp.gt.f32.partialorder %v717, 0.0
      %vm726 = vcmp.gt.f32.partialorder %v718, 0.0
      %v727 = vmul.f32 %v711, 0.2
      %v728 = vmul.f32 %v712, 0.2
      %v729 = vmul.f32 %v713, 0.2
      %v730 = vmul.f32 %v714, 0.2
      %v731 = vmul.f32 %v715, 0.2
      %v732 = vmul.f32 %v716, 0.2
      %v733 = vmul.f32 %v717, 0.2
      %v734 = vmul.f32 %v718, 0.2
      %v735 = vsel %vm719, %v711, %v727
      %v736 = vsel %vm720, %v712, %v728
      %v737 = vsel %vm721, %v713, %v729
      %v738 = vsel %vm722, %v714, %v730
      %v739 = vsel %vm723, %v715, %v731
      %v740 = vsel %vm724, %v716, %v732
      %v741 = vsel %vm725, %v717, %v733
      %v742 = vsel %vm726, %v718, %v734
      %v743 = vsel %vm288, 65537, 0
      %v744 = vsel %vm289, 65537, 0
      %v745 = vsel %vm290, 65537, 0
      %v746 = vsel %vm291, 65537, 0
      %v747 = vsel %vm292, 65537, 0
      %v748 = vsel %vm293, 65537, 0
      %v749 = vsel %vm294, 65537, 0
      %v750 = vsel %vm295, 65537, 0
      %v751 = vunpack.c.l.b16 %v743
      %v752 = vunpack.c.l.b16 %v744
      %v753 = vunpack.c.l.b16 %v745
      %v754 = vunpack.c.l.b16 %v746
      %v755 = vunpack.c.l.b16 %v747
      %v756 = vunpack.c.l.b16 %v748
      %v757 = vunpack.c.l.b16 %v749
      %v758 = vunpack.c.l.b16 %v750
      %vm759 = vcmp.ne.s32.totalorder %v751, 0
      %vm760 = vcmp.ne.s32.totalorder %v752, 0
      %vm761 = vcmp.ne.s32.totalorder %v753, 0
      %vm762 = vcmp.ne.s32.totalorder %v754, 0
      %vm763 = vcmp.ne.s32.totalorder %v755, 0
      %vm764 = vcmp.ne.s32.totalorder %v756, 0
      %vm765 = vcmp.ne.s32.totalorder %v757, 0
      %vm766 = vcmp.ne.s32.totalorder %v758, 0
      %v767 = vsel %vm759, %v735, -1e+30
      %v768 = vsel %vm760, %v736, -1e+30
      %v769 = vsel %vm761, %v737, -1e+30
      %v770 = vsel %vm762, %v738, -1e+30
      %v771 = vsel %vm763, %v739, -1e+30
      %v772 = vsel %vm764, %v740, -1e+30
      %v773 = vsel %vm765, %v741, -1e+30
      %v774 = vsel %vm766, %v742, -1e+30
      %775 = vmax.xlane.f32.xlu0 %v767
      %v776 = vpop.xlane.xlu0 %775
      %777 = vmax.xlane.f32.xlu0 %v768
      %v778 = vpop.xlane.xlu0 %777
      %779 = vmax.xlane.f32.xlu0 %v769
      %v780 = vpop.xlane.xlu0 %779
      %781 = vmax.xlane.f32.xlu0 %v770
      %v782 = vpop.xlane.xlu0 %781
      %783 = vmax.xlane.f32.xlu0 %v771
      %v784 = vpop.xlane.xlu0 %783
      %785 = vmax.xlane.f32.xlu0 %v772
      %v786 = vpop.xlane.xlu0 %785
      %787 = vmax.xlane.f32.xlu0 %v773
      %v788 = vpop.xlane.xlu0 %787
      %789 = vmax.xlane.f32.xlu0 %v774
      %v790 = vpop.xlane.xlu0 %789
      %v791 = vsub.f32 %v767, %v776
      %v792 = vsub.f32 %v768, %v778
      %v793 = vsub.f32 %v769, %v780
      %v794 = vsub.f32 %v770, %v782
      %v795 = vsub.f32 %v771, %v784
      %v796 = vsub.f32 %v772, %v786
      %v797 = vsub.f32 %v773, %v788
      %v798 = vsub.f32 %v774, %v790
      %v799 = vmul.f32 %v791, 1.442695
      %v800 = vpow.pop %v799
      %v801 = vmul.f32 %v792, 1.442695
      %v802 = vpow.pop %v801
      %v803 = vmul.f32 %v793, 1.442695
      %v804 = vpow.pop %v803
      %v805 = vmul.f32 %v794, 1.442695
      %v806 = vpow.pop %v805
      %v807 = vmul.f32 %v795, 1.442695
      %v808 = vpow.pop %v807
      %v809 = vmul.f32 %v796, 1.442695
      %v810 = vpow.pop %v809
      %v811 = vmul.f32 %v797, 1.442695
      %v812 = vpow.pop %v811
      %v813 = vmul.f32 %v798, 1.442695
      %v814 = vpow.pop %v813
      %815 = vadd.xlane.f32.xlu0 %v800
      %v816 = vpop.xlane.xlu0 %815
      %817 = vadd.xlane.f32.xlu0 %v802
      %v818 = vpop.xlane.xlu0 %817
      %819 = vadd.xlane.f32.xlu0 %v804
      %v820 = vpop.xlane.xlu0 %819
      %821 = vadd.xlane.f32.xlu0 %v806
      %v822 = vpop.xlane.xlu0 %821
      %823 = vadd.xlane.f32.xlu0 %v808
      %v824 = vpop.xlane.xlu0 %823
      %825 = vadd.xlane.f32.xlu0 %v810
      %v826 = vpop.xlane.xlu0 %825
      %827 = vadd.xlane.f32.xlu0 %v812
      %v828 = vpop.xlane.xlu0 %827
      %829 = vadd.xlane.f32.xlu0 %v814
      %v830 = vpop.xlane.xlu0 %829
      %v831 = vpack.c.bf16 %v802, %v800
      %v832 = vpack.c.bf16 %v806, %v804
      %v833 = vpack.c.bf16 %v810, %v808
      %v834 = vpack.c.bf16 %v814, %v812
      %835 = vmatprep.subr.bf16.mxu0 0
      %836 = vmatpush1.bf16.msra.mxu0 %v458
      %837 = vmatprep.subr.bf16.mxu0 0
      %838 = vmatpush1.bf16.msra.mxu0 %v459
      %839 = vmatprep.subr.bf16.mxu0 0
      %840 = vmatpush1.bf16.msra.mxu0 %v460
      %841 = vmatprep.subr.bf16.mxu0 0
      %842 = vmatpush1.bf16.msra.mxu0 %v461
      %843 = vmatprep.subr.bf16.mxu0 0
      %844 = vmatpush1.bf16.msra.mxu0 %v462
      %845 = vmatprep.subr.bf16.mxu0 0
      %846 = vmatpush1.bf16.msra.mxu0 %v463
      %847 = vmatprep.subr.bf16.mxu0 0
      %848 = vmatpush1.bf16.msra.mxu0 %v464
      %849 = vmatprep.subr.bf16.mxu0 0
      %850 = vmatpush1.bf16.msra.mxu0 %v465
      %851 = vmatprep.subr.bf16.mxu0 0
      %852 = vmatpush1.bf16.msra.mxu0 0
      %853 = vmatprep.subr.bf16.mxu0 0
      %854 = vmatpush1.bf16.msra.mxu0 0
      %855 = vmatprep.subr.bf16.mxu0 0
      %856 = vmatpush1.bf16.msra.mxu0 0
      %857 = vmatprep.subr.bf16.mxu0 0
      %858 = vmatpush1.bf16.msra.mxu0 0
      %859 = vmatprep.subr.bf16.mxu0 0
      %860 = vmatpush1.bf16.msra.mxu0 0
      %861 = vmatprep.subr.bf16.mxu0 0
      %862 = vmatpush1.bf16.msra.mxu0 0
      %863 = vmatprep.subr.bf16.mxu0 0
      %864 = vmatpush1.bf16.msra.mxu0 0
      %865 = vmatprep.subr.bf16.mxu0 0
      %866 = vmatpush1.bf16.msra.mxu0 0
      %867 = vmatprep.mubr.bf16.mxu0 0
      %868 = vmatmul.mubr.bf16.gmra.mrb[0].mxu0 %v831
      %v869 = vpop.f32.mrb[0].mxu0
      %v870 = vadd.f32 0.0, %v869
      %v871 = vpop.f32.mrb[0].mxu0
      %v872 = vpop.f32.mrb[0].mxu0
      %v873 = vadd.f32 0.0, %v872
      %v874 = vpop.f32.mrb[0].mxu0
      %875 = vmatprep.mubr.bf16.mxu0 0
      %876 = vmatmul.mubr.bf16.gmra.mrb[0].mxu0 %v832
      %v877 = vpop.f32.mrb[0].mxu0
      %v878 = vadd.f32 0.0, %v877
      %v879 = vpop.f32.mrb[0].mxu0
      %v880 = vpop.f32.mrb[0].mxu0
      %v881 = vadd.f32 0.0, %v880
      %v882 = vpop.f32.mrb[0].mxu0
      %883 = vmatprep.mubr.bf16.mxu0 0
      %884 = vmatmul.mubr.bf16.gmra.mrb[0].mxu0 %v833
      %v885 = vpop.f32.mrb[0].mxu0
      %v886 = vadd.f32 0.0, %v885
      %v887 = vpop.f32.mrb[0].mxu0
      %v888 = vpop.f32.mrb[0].mxu0
      %v889 = vadd.f32 0.0, %v888
      %v890 = vpop.f32.mrb[0].mxu0
      %891 = vmatprep.mubr.bf16.mxu0 0
      %892 = vmatmul.mubr.bf16.gmra.mrb[0].mxu0 %v834
      %v893 = vpop.f32.mrb[0].mxu0
      %v894 = vadd.f32 0.0, %v893
      %v895 = vpop.f32.mrb[0].mxu0
      %v896 = vpop.f32.mrb[0].mxu0
      %v897 = vadd.f32 0.0, %v896
      %v898 = vpop.f32.mrb[0].mxu0
      %899 = vdwg.mxu0
      %v900 = vrcp.pop %v816
      %v901 = vrcp.pop %v818
      %v902 = vrcp.pop %v820
      %v903 = vrcp.pop %v822
      %v904 = vrcp.pop %v824
      %v905 = vrcp.pop %v826
      %v906 = vrcp.pop %v828
      %v907 = vrcp.pop %v830
      %v908 = vmul.f32 %v870, %v900
      %v909 = vmul.f32 %v873, %v901
      %v910 = vmul.f32 %v878, %v902
      %v911 = vmul.f32 %v881, %v903
      %v912 = vmul.f32 %v886, %v904
      %v913 = vmul.f32 %v889, %v905
      %v914 = vmul.f32 %v894, %v906
      %v915 = vmul.f32 %v897, %v907
      %916 = vset.pattern.permute.xlu0 1
      %917 = vperm.xlu0 %916, %v637
      %v918 = vpop.permute.xlu0 %917
      %920 = vset.pattern.permute.xlu0 1
      %921 = vperm.xlu0 %920, %v640
      %v922 = vpop.permute.xlu0 %921
      %924 = vset.pattern.permute.xlu0 1
      %925 = vperm.xlu0 %924, %v645
      %v926 = vpop.permute.xlu0 %925
      %928 = vset.pattern.permute.xlu0 1
      %929 = vperm.xlu0 %928, %v648
      %v930 = vpop.permute.xlu0 %929
      %932 = vset.pattern.permute.xlu0 1
      %933 = vperm.xlu0 %932, %v653
      %v934 = vpop.permute.xlu0 %933
      %936 = vset.pattern.permute.xlu0 1
      %937 = vperm.xlu0 %936, %v656
      %v938 = vpop.permute.xlu0 %937
      %940 = vset.pattern.permute.xlu0 1
      %941 = vperm.xlu0 %940, %v661
      %v942 = vpop.permute.xlu0 %941
      %944 = vset.pattern.permute.xlu0 1
      %945 = vperm.xlu0 %944, %v664
      %v946 = vpop.permute.xlu0 %945
      %v948 = vlaneseq
      %v949 = vshrl.u32 %v948, 7
      %v950 = vsub.s32 1, %v949
      %v951 = vrot.slane %v546, %v950
      %v952 = vadd.f32 %v918, %v951
      %v953 = vadd.f32 %v922, %v951
      %v954 = vadd.f32 %v926, %v951
      %v955 = vadd.f32 %v930, %v951
      %v956 = vadd.f32 %v934, %v951
      %v957 = vadd.f32 %v938, %v951
      %v958 = vadd.f32 %v942, %v951
      %v959 = vadd.f32 %v946, %v951
      %vm960 = vcmp.gt.f32.partialorder %v952, 0.0
      %vm961 = vcmp.gt.f32.partialorder %v953, 0.0
      %vm962 = vcmp.gt.f32.partialorder %v954, 0.0
      %vm963 = vcmp.gt.f32.partialorder %v955, 0.0
      %vm964 = vcmp.gt.f32.partialorder %v956, 0.0
      %vm965 = vcmp.gt.f32.partialorder %v957, 0.0
      %vm966 = vcmp.gt.f32.partialorder %v958, 0.0
      %vm967 = vcmp.gt.f32.partialorder %v959, 0.0
      %v968 = vmul.f32 %v952, 0.2
      %v969 = vmul.f32 %v953, 0.2
      %v970 = vmul.f32 %v954, 0.2
      %v971 = vmul.f32 %v955, 0.2
      %v972 = vmul.f32 %v956, 0.2
      %v973 = vmul.f32 %v957, 0.2
      %v974 = vmul.f32 %v958, 0.2
      %v975 = vmul.f32 %v959, 0.2
      %v976 = vsel %vm960, %v952, %v968
      %v977 = vsel %vm961, %v953, %v969
      %v978 = vsel %vm962, %v954, %v970
      %v979 = vsel %vm963, %v955, %v971
      %v980 = vsel %vm964, %v956, %v972
      %v981 = vsel %vm965, %v957, %v973
      %v982 = vsel %vm966, %v958, %v974
      %v983 = vsel %vm967, %v959, %v975
      %v984 = vsel %vm759, %v976, -1e+30
      %v985 = vsel %vm760, %v977, -1e+30
      %v986 = vsel %vm761, %v978, -1e+30
      %v987 = vsel %vm762, %v979, -1e+30
      %v988 = vsel %vm763, %v980, -1e+30
      %v989 = vsel %vm764, %v981, -1e+30
      %v990 = vsel %vm765, %v982, -1e+30
      %v991 = vsel %vm766, %v983, -1e+30
      %992 = vmax.xlane.f32.xlu0 %v984
      %v993 = vpop.xlane.xlu0 %992
      %994 = vmax.xlane.f32.xlu0 %v985
      %v995 = vpop.xlane.xlu0 %994
      %996 = vmax.xlane.f32.xlu0 %v986
      %v997 = vpop.xlane.xlu0 %996
      %998 = vmax.xlane.f32.xlu0 %v987
      %v999 = vpop.xlane.xlu0 %998
      %1000 = vmax.xlane.f32.xlu0 %v988
      %v1001 = vpop.xlane.xlu0 %1000
      %1002 = vmax.xlane.f32.xlu0 %v989
      %v1003 = vpop.xlane.xlu0 %1002
      %1004 = vmax.xlane.f32.xlu0 %v990
      %v1005 = vpop.xlane.xlu0 %1004
      %1006 = vmax.xlane.f32.xlu0 %v991
      %v1007 = vpop.xlane.xlu0 %1006
      %v1008 = vsub.f32 %v984, %v993
      %v1009 = vsub.f32 %v985, %v995
      %v1010 = vsub.f32 %v986, %v997
      %v1011 = vsub.f32 %v987, %v999
      %v1012 = vsub.f32 %v988, %v1001
      %v1013 = vsub.f32 %v989, %v1003
      %v1014 = vsub.f32 %v990, %v1005
      %v1015 = vsub.f32 %v991, %v1007
      %v1016 = vmul.f32 %v1008, 1.442695
      %v1017 = vpow.pop %v1016
      %v1018 = vmul.f32 %v1009, 1.442695
      %v1019 = vpow.pop %v1018
      %v1020 = vmul.f32 %v1010, 1.442695
      %v1021 = vpow.pop %v1020
      %v1022 = vmul.f32 %v1011, 1.442695
      %v1023 = vpow.pop %v1022
      %v1024 = vmul.f32 %v1012, 1.442695
      %v1025 = vpow.pop %v1024
      %v1026 = vmul.f32 %v1013, 1.442695
      %v1027 = vpow.pop %v1026
      %v1028 = vmul.f32 %v1014, 1.442695
      %v1029 = vpow.pop %v1028
      %v1030 = vmul.f32 %v1015, 1.442695
      %v1031 = vpow.pop %v1030
      %1032 = vadd.xlane.f32.xlu0 %v1017
      %v1033 = vpop.xlane.xlu0 %1032
      %1034 = vadd.xlane.f32.xlu0 %v1019
      %v1035 = vpop.xlane.xlu0 %1034
      %1036 = vadd.xlane.f32.xlu0 %v1021
      %v1037 = vpop.xlane.xlu0 %1036
      %1038 = vadd.xlane.f32.xlu0 %v1023
      %v1039 = vpop.xlane.xlu0 %1038
      %1040 = vadd.xlane.f32.xlu0 %v1025
      %v1041 = vpop.xlane.xlu0 %1040
      %1042 = vadd.xlane.f32.xlu0 %v1027
      %v1043 = vpop.xlane.xlu0 %1042
      %1044 = vadd.xlane.f32.xlu0 %v1029
      %v1045 = vpop.xlane.xlu0 %1044
      %1046 = vadd.xlane.f32.xlu0 %v1031
      %v1047 = vpop.xlane.xlu0 %1046
      %v1048 = vpack.c.bf16 %v1019, %v1017
      %v1049 = vpack.c.bf16 %v1023, %v1021
      %v1050 = vpack.c.bf16 %v1027, %v1025
      %v1051 = vpack.c.bf16 %v1031, %v1029
      %1060 = vrot.lane.b32.xlu0 %v458, 96
      %v1061 = vpop.permute.xlu0 %1060
      %1062 = vrot.lane.b32.xlu0 %v459, 96
      %v1063 = vpop.permute.xlu0 %1062
      %1064 = vrot.lane.b32.xlu0 %v460, 96
      %v1065 = vpop.permute.xlu0 %1064
      %1066 = vrot.lane.b32.xlu0 %v461, 96
      %v1067 = vpop.permute.xlu0 %1066
      %1068 = vrot.lane.b32.xlu0 %v462, 96
      %v1069 = vpop.permute.xlu0 %1068
      %1070 = vrot.lane.b32.xlu0 %v463, 96
      %v1071 = vpop.permute.xlu0 %1070
      %1072 = vrot.lane.b32.xlu0 %v464, 96
      %v1073 = vpop.permute.xlu0 %1072
      %1074 = vrot.lane.b32.xlu0 %v465, 96
      %v1075 = vpop.permute.xlu0 %1074
      %1084 = vmatprep.subr.bf16.mxu0 0
      %1085 = vmatpush1.bf16.msra.mxu0 %v1061
      %1086 = vmatprep.subr.bf16.mxu0 0
      %1087 = vmatpush1.bf16.msra.mxu0 %v1063
      %1088 = vmatprep.subr.bf16.mxu0 0
      %1089 = vmatpush1.bf16.msra.mxu0 %v1065
      %1090 = vmatprep.subr.bf16.mxu0 0
      %1091 = vmatpush1.bf16.msra.mxu0 %v1067
      %1092 = vmatprep.subr.bf16.mxu0 0
      %1093 = vmatpush1.bf16.msra.mxu0 %v1069
      %1094 = vmatprep.subr.bf16.mxu0 0
      %1095 = vmatpush1.bf16.msra.mxu0 %v1071
      %1096 = vmatprep.subr.bf16.mxu0 0
      %1097 = vmatpush1.bf16.msra.mxu0 %v1073
      %1098 = vmatprep.subr.bf16.mxu0 0
      %1099 = vmatpush1.bf16.msra.mxu0 %v1075
      %1100 = vmatprep.subr.bf16.mxu0 0
      %1101 = vmatpush1.bf16.msra.mxu0 0
      %1102 = vmatprep.subr.bf16.mxu0 0
      %1103 = vmatpush1.bf16.msra.mxu0 0
      %1104 = vmatprep.subr.bf16.mxu0 0
      %1105 = vmatpush1.bf16.msra.mxu0 0
      %1106 = vmatprep.subr.bf16.mxu0 0
      %1107 = vmatpush1.bf16.msra.mxu0 0
      %1108 = vmatprep.subr.bf16.mxu0 0
      %1109 = vmatpush1.bf16.msra.mxu0 0
      %1110 = vmatprep.subr.bf16.mxu0 0
      %1111 = vmatpush1.bf16.msra.mxu0 0
      %1112 = vmatprep.subr.bf16.mxu0 0
      %1113 = vmatpush1.bf16.msra.mxu0 0
      %1114 = vmatprep.subr.bf16.mxu0 0
      %1115 = vmatpush1.bf16.msra.mxu0 0
      %1116 = vmatprep.mubr.bf16.mxu0 0
      %1117 = vmatmul.mubr.bf16.gmra.mrb[0].mxu0 %v1048
      %v1118 = vpop.f32.mrb[0].mxu0
      %v1119 = vadd.f32 0.0, %v1118
      %v1120 = vpop.f32.mrb[0].mxu0
      %v1121 = vpop.f32.mrb[0].mxu0
      %v1122 = vadd.f32 0.0, %v1121
      %v1123 = vpop.f32.mrb[0].mxu0
      %1124 = vmatprep.mubr.bf16.mxu0 0
      %1125 = vmatmul.mubr.bf16.gmra.mrb[0].mxu0 %v1049
      %v1126 = vpop.f32.mrb[0].mxu0
      %v1127 = vadd.f32 0.0, %v1126
      %v1128 = vpop.f32.mrb[0].mxu0
      %v1129 = vpop.f32.mrb[0].mxu0
      %v1130 = vadd.f32 0.0, %v1129
      %v1131 = vpop.f32.mrb[0].mxu0
      %1132 = vmatprep.mubr.bf16.mxu0 0
      %1133 = vmatmul.mubr.bf16.gmra.mrb[0].mxu0 %v1050
      %v1134 = vpop.f32.mrb[0].mxu0
      %v1135 = vadd.f32 0.0, %v1134
      %v1136 = vpop.f32.mrb[0].mxu0
      %v1137 = vpop.f32.mrb[0].mxu0
      %v1138 = vadd.f32 0.0, %v1137
      %v1139 = vpop.f32.mrb[0].mxu0
      %1140 = vmatprep.mubr.bf16.mxu0 0
      %1141 = vmatmul.mubr.bf16.gmra.mrb[0].mxu0 %v1051
      %v1142 = vpop.f32.mrb[0].mxu0
      %v1143 = vadd.f32 0.0, %v1142
      %v1144 = vpop.f32.mrb[0].mxu0
      %v1145 = vpop.f32.mrb[0].mxu0
      %v1146 = vadd.f32 0.0, %v1145
      %v1147 = vpop.f32.mrb[0].mxu0
      %1148 = vdwg.mxu0
      %v1149 = vrcp.pop %v1033
      %v1150 = vrcp.pop %v1035
      %v1151 = vrcp.pop %v1037
      %v1152 = vrcp.pop %v1039
      %v1153 = vrcp.pop %v1041
      %v1154 = vrcp.pop %v1043
      %v1155 = vrcp.pop %v1045
      %v1156 = vrcp.pop %v1047
      %v1157 = vmul.f32 %v1119, %v1149
      %v1158 = vmul.f32 %v1122, %v1150
      %v1159 = vmul.f32 %v1127, %v1151
      %v1160 = vmul.f32 %v1130, %v1152
      %v1161 = vmul.f32 %v1135, %v1153
      %v1162 = vmul.f32 %v1138, %v1154
      %v1163 = vmul.f32 %v1143, %v1155
      %v1164 = vmul.f32 %v1146, %v1156
      %v1165 = vld [vmem:[%s5] sm:$0x1]
      %1174 = vrot.lane.b32.xlu0 %v1157, 32
      %v1175 = vpop.permute.xlu0 %1174
      %1176 = vrot.lane.b32.xlu0 %v1158, 32
      %v1177 = vpop.permute.xlu0 %1176
      %1178 = vrot.lane.b32.xlu0 %v1159, 32
      %v1179 = vpop.permute.xlu0 %1178
      %1180 = vrot.lane.b32.xlu0 %v1160, 32
      %v1181 = vpop.permute.xlu0 %1180
      %1182 = vrot.lane.b32.xlu0 %v1161, 32
      %v1183 = vpop.permute.xlu0 %1182
      %1184 = vrot.lane.b32.xlu0 %v1162, 32
      %v1185 = vpop.permute.xlu0 %1184
      %1186 = vrot.lane.b32.xlu0 %v1163, 32
      %v1187 = vpop.permute.xlu0 %1186
      %1188 = vrot.lane.b32.xlu0 %v1164, 32
      %v1189 = vpop.permute.xlu0 %1188
      %v1198 = vsel %vm336, %v908, %v1175
      %v1199 = vsel %vm336, %v909, %v1177
      %v1200 = vsel %vm336, %v910, %v1179
      %v1201 = vsel %vm336, %v911, %v1181
      %v1202 = vsel %vm336, %v912, %v1183
      %v1203 = vsel %vm336, %v913, %v1185
      %v1204 = vsel %vm336, %v914, %v1187
      %v1205 = vsel %vm336, %v915, %v1189
      %v1207 = vlaneseq
      %v1208 = vshrl.u32 %v1207, 7
      %v1209 = vsub.s32 0, %v1208
      %v1210 = vrot.slane %v1165, %v1209
      %v1212 = vadd.f32 %v1198, %v1210
      %v1213 = vadd.f32 %v1199, %v1210
      %v1214 = vadd.f32 %v1200, %v1210
      %v1215 = vadd.f32 %v1201, %v1210
      %v1216 = vadd.f32 %v1202, %v1210
      %v1217 = vadd.f32 %v1203, %v1210
      %v1218 = vadd.f32 %v1204, %v1210
      %v1219 = vadd.f32 %v1205, %v1210
      %v1220 = vmax.f32 %v1212, 0.0
      %v1221 = vmax.f32 %v1213, 0.0
      %v1222 = vmax.f32 %v1214, 0.0
      %v1223 = vmax.f32 %v1215, 0.0
      %v1224 = vmax.f32 %v1216, 0.0
      %v1225 = vmax.f32 %v1217, 0.0
      %v1226 = vmax.f32 %v1218, 0.0
      %v1227 = vmax.f32 %v1219, 0.0
      %vm1228 = vcmask 523264
      %1229 = vst.msk [vmem:[%s275] sm:$0xff] %vm1228, %v1220
      %1230 = vst.msk [vmem:[%s275 + $0x8] sm:$0xff] %vm1228, %v1221
      %1231 = vst.msk [vmem:[%s275 + $0x10] sm:$0xff] %vm1228, %v1222
      %1232 = vst.msk [vmem:[%s275 + $0x18] sm:$0xff] %vm1228, %v1223
      %1233 = vst.msk [vmem:[%s275 + $0x20] sm:$0xff] %vm1228, %v1224
      %1234 = vst.msk [vmem:[%s275 + $0x28] sm:$0xff] %vm1228, %v1225
      %1235 = vst.msk [vmem:[%s275 + $0x30] sm:$0xff] %vm1228, %v1226
      %1236 = vst.msk [vmem:[%s275 + $0x38] sm:$0xff] %vm1228, %v1227
      %s1237 = smul.u32 8, %s17
      %p1238 = scmp.lt.s32.totalorder %s1237, 15
      %s1239 = scalar_select %p1238, %s1237, 15
      %s1240 = smul.addr %s1239, 8
      %s1241 = scalar_lea.vmem %s6, %s1240
      // Predicated region
      $region45: #{tpu_custom_call.1} parent=43 // pred_check
        %p1242 = pneg %p171
      $region46: #{tpu_custom_call.1} parent=43 // pred_check_branch
        %1244 = sbr.rel (%p1242) target = $region48
      $region47: #{tpu_custom_call.1} parent=43 // pred_region
        %s1245 = smul.u32 8, %s17
      $region48: #{tpu_custom_call.1} parent=43 // pred_fallthru
        _
    $region44: #{tpu_custom_call.1} parent=5 // pred_fallthru
      _
    %p1246 = scmp.le.s32.totalorder 2, %s12
    // Predicated region
    $region49: #{tpu_custom_call.1} parent=5 // pred_check
      %p1247 = pneg %p1246
    $region50: #{tpu_custom_call.1} parent=5 // pred_check_branch
      %1249 = sbr.rel (%p1247) target = $region52
    $region51: #{tpu_custom_call.1} parent=5 // pred_region
      %s1250 = ssub.s32 %s12, 2
      // Predicated region
      $region53: #{tpu_custom_call.1} parent=51 // pred_check
        %p1251 = pneg %p177
      $region54: #{tpu_custom_call.1} parent=51 // pred_check_branch
        %1253 = sbr.rel (%p1251) target = $region56
      $region55: #{tpu_custom_call.1} parent=51 // pred_region
        %s1254 = smul.u32 8, %s18
        %p1255 = scmp.lt.s32.totalorder %s1254, 15
        %s1256 = scalar_select %p1255, %s1254, 15
        %s1257 = smul.addr %s1256, 8
        %s1258 = scalar_lea.vmem %s6, %s1257
      $region56: #{tpu_custom_call.1} parent=51 // pred_fallthru
        _
    $region52: #{tpu_custom_call.1} parent=5 // pred_fallthru
      _
  $region6: #{tpu_custom_call.1} parent=0 // loop_footer
    %s16 = sadd.s32 1, %s12
  $region7: #{tpu_custom_call.1} parent=0 // loop_footer_branch
    %11 = sbr.rel target = $region3
  $region8: #{tpu_custom_call.1} parent=0 // loop_exit
    _

</llo_original>
